<compile_context>
chip_gen: v6e
topology: v6e:2x2x1
jax: 0.10.0
libtpu: 0.0.40
codegen_flags: <defaults>
</compile_context>

<pallas_src>
import jax
import jax.numpy as jnp
from jax.experimental import pallas as pl
from jax.experimental.pallas import tpu as pltpu


# ----------------------------------------------------------------------------
# Kernel factory
# ----------------------------------------------------------------------------
def _make_newloss_kernel(base, distance, temperature, temp_to, epsilon, D,
                         tile_rows, rows):
    """Build a kernel specialized (statically) on the NEWLoss config & tiling."""
    inv_temp = 1.0 / float(temperature)
    scale = float(temperature) != 1.0
    epsilon = float(epsilon)

    num_tiles = -(-rows // tile_rows)              # ceil
    valid_last = rows - (num_tiles - 1) * tile_rows
    need_mask = valid_last != tile_rows            # last tile is ragged
    C = min(D, 128)                                # EM cumsum chunk width

    def kernel(*refs):
        if distance == "EM":
            pred_ref, act_ref, tri_ref, base_out_ref, dist_out_ref = refs
        else:
            pred_ref, act_ref, base_out_ref, dist_out_ref = refs

        # Upcast on the VPU; HBM traffic stays in the native dtype.
        pred = pred_ref[...].astype(jnp.float32)
        act = act_ref[...].astype(jnp.float32)

        if need_mask:
            # Last tile reads past the true row count; whatever garbage the
            # out-of-bounds region holds is zeroed here.  Zero rows contribute
            # exactly 0 to the base loss, KL and EM terms.
            is_last = pl.program_id(0) == (num_tiles - 1)
            limit = jnp.where(is_last, valid_last, tile_rows)
            row_id = jax.lax.broadcasted_iota(jnp.int32, pred.shape, 0)
            valid = row_id < limit
            pred = jnp.where(valid, pred, 0.0)
            act = jnp.where(valid, act, 0.0)

        # ---- base loss partial (sum over the tile; mean taken in wrapper) ----
        diff = pred - act
        if base == "MSE":
            base_partial = jnp.sum(diff * diff)
        else:  # "MAE"
            base_partial = jnp.sum(jnp.abs(diff))

        # ---- temperature-scaled inputs for the softmaxes ----
        if temp_to == "both":
            ps = pred * inv_temp if scale else pred
            qs = act * inv_temp if scale else act
        elif temp_to == "true":
            ps = pred
            qs = act * inv_temp if scale else act
        else:
            ps = pred * inv_temp if scale else pred
            qs = act

        # ---- distance partial ----
        if distance == "KL":
            # log-softmax identity: per-element EUP work is just the 2 exps;
            # logs + reciprocal are per-row.
            m_p = jnp.max(ps, axis=-1, keepdims=True)
            m_q = jnp.max(qs, axis=-1, keepdims=True)
            xp = ps - m_p
            xq = qs - m_q
            e_p = jnp.exp(xp)
            e_q = jnp.exp(xq)
            s_p = jnp.sum(e_p, axis=-1, keepdims=True)
            s_q = jnp.sum(e_q, axis=-1, keepdims=True)
            p = e_p * pl.reciprocal(s_p, approx=False)
            log_ratio = (xp - jnp.log(s_p)) - (xq - jnp.log(s_q))
            dist_partial = jnp.sum((p + epsilon) * log_ratio)
        else:  # "EM": blocked prefix-sum via <=128-wide triangular MXU matmuls
            def _softmax(x):
                m = jnp.max(x, axis=-1, keepdims=True)
                e = jnp.exp(x - m)
                s = jnp.sum(e, axis=-1, keepdims=True)
                return e * pl.reciprocal(s, approx=False)

            p = _softmax(ps)
            q = _softmax(qs)
            d = p - q                      # the +epsilon on p and q cancels exactly
            tri = tri_ref[...]             # (C, C) upper-triangular ones, resident
            n_chunks = -(-D // C)
            prefix = jnp.zeros((d.shape[0], 1), jnp.float32)
            dist_partial = jnp.float32(0.0)
            for j in range(n_chunks):      # static, unrolled
                w = min(C, D - j * C)
                chunk = d[:, j * C:j * C + w]
                cdf = jnp.dot(chunk, tri[:w, :w],
                              preferred_element_type=jnp.float32) + prefix
                dist_partial = dist_partial + jnp.sum(jnp.abs(cdf))
                if j + 1 < n_chunks:
                    prefix = cdf[:, w - 1:w]

        # Per-tile partial outputs (independent blocks -> grid is "parallel").
        base_out_ref[...] = jnp.broadcast_to(base_partial, base_out_ref.shape)
        dist_out_ref[...] = jnp.broadcast_to(dist_partial, dist_out_ref.shape)

    return kernel


# ----------------------------------------------------------------------------
# Tiling helpers
# ----------------------------------------------------------------------------
def _vmem_capacity_bytes():
    try:
        return int(pltpu.get_tpu_info().vmem_capacity_bytes)
    except Exception:
        return 64 * 1024 * 1024  # conservative (v7x-sized) default


def _pick_tile_rows(rows, D, vmem_cap_bytes):
    """Row tile (multiple of 8) sized per-generation on the f32 working set."""
    if rows <= 8:
        return rows                               # full-dim block (always legal)
    rows8 = (rows // 8) * 8                       # largest multiple of 8 <= rows

    if vmem_cap_bytes <= 72 * 1024 * 1024:        # 64-MiB-VMEM parts (v7x-class)
        target_f32_bytes = 1 * 1024 * 1024
    else:                                         # 128-MiB-VMEM parts (v5e / v6e)
        target_f32_bytes = 3 * 1024 * 1024

    tr = target_f32_bytes // max(1, D * 4)
    if rows >= 64:
        # Keep >= 2 grid tiles so dual-TC parts (v7x) can split the grid.
        tr = min(tr, max(8, ((rows // 2) // 8) * 8))
    tr = max(8, min(int(tr), rows8))
    tr = (tr // 8) * 8
    return max(8, tr)


# ----------------------------------------------------------------------------
# Public wrapper
# ----------------------------------------------------------------------------
def new_loss(
    predicted,
    actual,
    *,
    base="MSE",
    distance="KL",
    Lambda=0.01,
    temperature=1.0,
    temp_to="both",
    epsilon=1e-8,
):
    assert predicted.shape == actual.shape
    D = predicted.shape[-1]
    rows = predicted.size // D

    # Keep the native dtype over HBM (bf16 stays bf16); upcast inside the kernel.
    p2 = predicted.reshape(rows, D)
    a2 = actual.reshape(rows, D)
    itemsize = p2.dtype.itemsize

    vmem_cap = _vmem_capacity_bytes()
    tile_rows = _pick_tile_rows(rows, D, vmem_cap)
    num_tiles = -(-rows // tile_rows)  # ceil; last tile masked in-kernel (no pad)

    kernel = _make_newloss_kernel(
        base, distance, float(temperature), temp_to, float(epsilon),
        D, tile_rows, rows,
    )

    part_shape = (num_tiles, 8, 128)
    part_block = pl.BlockSpec((1, 8, 128), lambda i: (i, 0, 0))

    in_specs = [
        pl.BlockSpec((tile_rows, D), lambda i: (i, 0)),
        pl.BlockSpec((tile_rows, D), lambda i: (i, 0)),
    ]
    args = [p2, a2]

    C = min(D, 128)
    tri_bytes = 0
    if distance == "EM":
        # Upper-triangular ones block, built once; constant index_map keeps it
        # resident in VMEM across the whole grid.
        r = jax.lax.broadcasted_iota(jnp.int32, (C, C), 0)
        c = jax.lax.broadcasted_iota(jnp.int32, (C, C), 1)
        tri = (r <= c).astype(jnp.float32)
        in_specs.append(pl.BlockSpec((C, C), lambda i: (0, 0)))
        args.append(tri)
        tri_bytes = C * C * 4

    # VMEM accounting: double-buffered native-dtype inputs, ~12 live f32
    # intermediates of one tile, EM extras (resident tri + cdf chunk), small
    # partial-output blocks, plus slack; clamped per generation.
    block_bytes = tile_rows * D * itemsize
    f32_block_bytes = tile_rows * D * 4
    em_extra = (2 * tri_bytes + tile_rows * C * 4) if distance == "EM" else 0
    need = (4 * block_bytes + 12 * f32_block_bytes + em_extra
            + 2 * 2 * (8 * 128 * 4) + (2 << 20))
    gen_cap = (56 << 20) if vmem_cap <= (72 << 20) else (100 << 20)
    vmem_limit = int(min(max(need, 32 << 20), gen_cap))

    base_parts, dist_parts = pl.pallas_call(
        kernel,
        out_shape=(
            jax.ShapeDtypeStruct(part_shape, jnp.float32),
            jax.ShapeDtypeStruct(part_shape, jnp.float32),
        ),
        grid_spec=pltpu.PrefetchScalarGridSpec(
            num_scalar_prefetch=0,
            grid=(num_tiles,),
            in_specs=in_specs,
            out_specs=[part_block, part_block],
        ),
        compiler_params=pltpu.CompilerParams(
            dimension_semantics=("parallel",),  # independent per-tile outputs
            vmem_limit_bytes=vmem_limit,
        ),
    )(*args)

    # Final reduction in the wrapper (pairwise sum: faster + more accurate than
    # a carried scalar accumulator inside the kernel).
    base_sum = jnp.sum(base_parts[:, 0, 0])
    dist_sum = jnp.sum(dist_parts[:, 0, 0])

    base_loss = base_sum / jnp.float32(rows * D)  # nn.MSELoss / nn.L1Loss mean
    return base_loss + jnp.float32(Lambda) * dist_sum


# ----------------------------------------------------------------------------
# Pure-JAX reference (mirrors the PyTorch module)
# ----------------------------------------------------------------------------
def _reference_new_loss(
    predicted, actual, *, base="MSE", distance="KL", Lambda=0.01,
    temperature=1.0, temp_to="both", epsilon=1e-8
):
    predicted = predicted.astype(jnp.float32)
    actual = actual.astype(jnp.float32)
    if temp_to == "both":
        p = jax.nn.softmax(predicted / temperature, -1) + epsilon
        q = jax.nn.softmax(actual / temperature, -1) + epsilon
    elif temp_to == "true":
        p = jax.nn.softmax(predicted, -1) + epsilon
        q = jax.nn.softmax(actual / temperature, -1) + epsilon
    else:
        p = jax.nn.softmax(predicted / temperature, -1) + epsilon
        q = jax.nn.softmax(actual, -1) + epsilon
    if distance == "KL":
        dist = jnp.sum(p * jnp.log(p / q))
    else:
        dist = jnp.sum(jnp.abs(jnp.cumsum(p, -1) - jnp.cumsum(q, -1)))
    if base == "MSE":
        b = jnp.mean((predicted - actual) ** 2)
    else:
        b = jnp.mean(jnp.abs(predicted - actual))
    return b + Lambda * dist


if __name__ == "__main__":
    key = jax.random.PRNGKey(0)
    k1, k2, k3, k4 = jax.random.split(key, 4)
    # small shapes: batch=2, seq=8, hidden=32 (softmax axis = last dim)
    predicted = jax.random.normal(k1, (2, 8, 32), dtype=jnp.float32)
    actual = jax.random.normal(k2, (2, 8, 32), dtype=jnp.float32)

    # 1) Default config: MSE base + KL distance (log-softmax path).
    loss = jax.block_until_ready(new_loss(predicted, actual))
    ref = _reference_new_loss(predicted, actual)
    assert jnp.allclose(loss, ref, rtol=1e-5, atol=1e-5), (loss, ref)

    # 2) MAE base + EM distance (blocked MXU prefix-sum path).
    loss_em = jax.block_until_ready(
        new_loss(predicted, actual, base="MAE", distance="EM"))
    ref_em = _reference_new_loss(predicted, actual, base="MAE", distance="EM")
    assert jnp.allclose(loss_em, ref_em, rtol=1e-5, atol=1e-5), (loss_em, ref_em)

    # 3) Ragged row count (exercises the in-kernel last-tile mask, multi-tile
    #    grid) + non-unit temperature applied to the true distribution only.
    p3 = jax.random.normal(k3, (2, 7, 32), dtype=jnp.float32)
    a3 = jax.random.normal(k4, (2, 7, 32), dtype=jnp.float32)
    loss3 = jax.block_until_ready(
        new_loss(p3, a3, base="MAE", distance="KL",
                 temperature=2.0, temp_to="true"))
    ref3 = _reference_new_loss(p3, a3, base="MAE", distance="KL",
                               temperature=2.0, temp_to="true")
    assert jnp.allclose(loss3, ref3, rtol=1e-5, atol=1e-5), (loss3, ref3)

    # 4) Ragged rows + EM + temperature on the predicted distribution.
    loss4 = jax.block_until_ready(
        new_loss(p3, a3, base="MSE", distance="EM",
                 temperature=0.5, temp_to="pred"))
    ref4 = _reference_new_loss(p3, a3, base="MSE", distance="EM",
                               temperature=0.5, temp_to="pred")
    assert jnp.allclose(loss4, ref4, rtol=1e-5, atol=1e-5), (loss4, ref4)

    print("KERNEL_OK")
</pallas_src>

<mosaic_0001>
module attributes {stable_mosaic.version = 11 : i64} {
  func.func @kernel(%arg0: i32, %arg1: memref<16x32xf32, #tpu.memory_space<vmem>>, %arg2: memref<16x32xf32, #tpu.memory_space<vmem>>, %arg3: memref<1x8x128xf32, #tpu.memory_space<vmem>>, %arg4: memref<1x8x128xf32, #tpu.memory_space<vmem>>) attributes {dimension_semantics = [#tpu.dimension_semantics<parallel>], iteration_bounds = array<i64: 1>, scalar_prefetch = 0 : i64, scratch_operands = 0 : i64, tpu.core_type = #tpu.core_type<tc>, window_params = [{transform_indices = @transform_0, window_bounds = array<i64: 16, 32>}, {transform_indices = @transform_1, window_bounds = array<i64: 16, 32>}, {transform_indices = @transform_2, window_bounds = array<i64: 1, 8, 128>}, {transform_indices = @transform_3, window_bounds = array<i64: 1, 8, 128>}]} {
    %c0 = arith.constant 0 : index
    %c0_0 = arith.constant 0 : index
    %0 = vector.load %arg1[%c0, %c0_0] : memref<16x32xf32, #tpu.memory_space<vmem>>, vector<16x32xf32>
    %c0_1 = arith.constant 0 : index
    %c0_2 = arith.constant 0 : index
    %1 = vector.load %arg2[%c0_1, %c0_2] : memref<16x32xf32, #tpu.memory_space<vmem>>, vector<16x32xf32>
    %2 = arith.subf %0, %1 : vector<16x32xf32>
    %3 = arith.mulf %2, %2 : vector<16x32xf32>
    %4 = vector.shape_cast %3 : vector<16x32xf32> to vector<1x16x32xf32>
    %cst = arith.constant dense<0.000000e+00> : vector<1xf32>
    %5 = vector.multi_reduction <add>, %4, %cst [1, 2] : vector<1x16x32xf32> to vector<1xf32>
    %6 = vector.shape_cast %5 : vector<1xf32> to vector<1x1x1xf32>
    %7 = vector.extract %6[0, 0, 0] : f32 from vector<1x1x1xf32>
    %cst_3 = arith.constant dense<0xFF800000> : vector<16xf32>
    %8 = vector.multi_reduction <maximumf>, %0, %cst_3 [1] : vector<16x32xf32> to vector<16xf32>
    %9 = vector.shape_cast %8 : vector<16xf32> to vector<16x1xf32>
    %cst_4 = arith.constant dense<0xFF800000> : vector<16xf32>
    %10 = vector.multi_reduction <maximumf>, %1, %cst_4 [1] : vector<16x32xf32> to vector<16xf32>
    %11 = vector.shape_cast %10 : vector<16xf32> to vector<16x1xf32>
    %12 = vector.broadcast %9 : vector<16x1xf32> to vector<16x32xf32>
    %13 = arith.subf %0, %12 : vector<16x32xf32>
    %14 = vector.broadcast %11 : vector<16x1xf32> to vector<16x32xf32>
    %15 = arith.subf %1, %14 : vector<16x32xf32>
    %16 = math.exp %13 : vector<16x32xf32>
    %17 = math.exp %15 : vector<16x32xf32>
    %cst_5 = arith.constant dense<0.000000e+00> : vector<16xf32>
    %18 = vector.multi_reduction <add>, %16, %cst_5 [1] : vector<16x32xf32> to vector<16xf32>
    %19 = vector.shape_cast %18 : vector<16xf32> to vector<16x1xf32>
    %cst_6 = arith.constant dense<0.000000e+00> : vector<16xf32>
    %20 = vector.multi_reduction <add>, %17, %cst_6 [1] : vector<16x32xf32> to vector<16xf32>
    %21 = vector.shape_cast %20 : vector<16xf32> to vector<16x1xf32>
    %22 = tpu.reciprocal %19 : vector<16x1xf32> -> vector<16x1xf32>
    %23 = vector.broadcast %22 : vector<16x1xf32> to vector<16x32xf32>
    %24 = arith.mulf %16, %23 : vector<16x32xf32>
    %25 = math.log %19 : vector<16x1xf32>
    %26 = vector.broadcast %25 : vector<16x1xf32> to vector<16x32xf32>
    %27 = arith.subf %13, %26 : vector<16x32xf32>
    %28 = math.log %21 : vector<16x1xf32>
    %29 = vector.broadcast %28 : vector<16x1xf32> to vector<16x32xf32>
    %30 = arith.subf %15, %29 : vector<16x32xf32>
    %31 = arith.subf %27, %30 : vector<16x32xf32>
    %cst_7 = arith.constant 9.99999993E-9 : f32
    %32 = vector.broadcast %cst_7 : f32 to vector<16x32xf32>
    %33 = arith.addf %24, %32 : vector<16x32xf32>
    %34 = arith.mulf %33, %31 : vector<16x32xf32>
    %35 = vector.shape_cast %34 : vector<16x32xf32> to vector<1x16x32xf32>
    %cst_8 = arith.constant dense<0.000000e+00> : vector<1xf32>
    %36 = vector.multi_reduction <add>, %35, %cst_8 [1, 2] : vector<1x16x32xf32> to vector<1xf32>
    %37 = vector.shape_cast %36 : vector<1xf32> to vector<1x1x1xf32>
    %38 = vector.extract %37[0, 0, 0] : f32 from vector<1x1x1xf32>
    %39 = vector.broadcast %7 : f32 to vector<1x8x128xf32>
    %c0_9 = arith.constant 0 : index
    %c0_10 = arith.constant 0 : index
    %c0_11 = arith.constant 0 : index
    %40 = vector.load %arg3[%c0_9, %c0_10, %c0_11] : memref<1x8x128xf32, #tpu.memory_space<vmem>>, vector<1x8x128xf32>
    tpu.vector_store %arg3[%c0_9, %c0_10, %c0_11], %39 {strides = array<i32>} : memref<1x8x128xf32, #tpu.memory_space<vmem>>, vector<1x8x128xf32>,
    %41 = vector.broadcast %38 : f32 to vector<1x8x128xf32>
    %c0_12 = arith.constant 0 : index
    %c0_13 = arith.constant 0 : index
    %c0_14 = arith.constant 0 : index
    %42 = vector.load %arg4[%c0_12, %c0_13, %c0_14] : memref<1x8x128xf32, #tpu.memory_space<vmem>>, vector<1x8x128xf32>
    tpu.vector_store %arg4[%c0_12, %c0_13, %c0_14], %41 {strides = array<i32>} : memref<1x8x128xf32, #tpu.memory_space<vmem>>, vector<1x8x128xf32>,
    return
  }
  func.func @transform_0(%arg0: i32) -> (i32, i32) {
    %c0_i32 = arith.constant 0 : i32
    %c0_i32_0 = arith.constant 0 : i32
    return %arg0, %c0_i32 : i32, i32
  }
  func.func @transform_1(%arg0: i32) -> (i32, i32) {
    %c0_i32 = arith.constant 0 : i32
    %c0_i32_0 = arith.constant 0 : i32
    return %arg0, %c0_i32 : i32, i32
  }
  func.func @transform_2(%arg0: i32) -> (i32, i32, i32) {
    %c0_i32 = arith.constant 0 : i32
    %c0_i32_0 = arith.constant 0 : i32
    %c0_i32_1 = arith.constant 0 : i32
    return %arg0, %c0_i32, %c0_i32_0 : i32, i32, i32
  }
  func.func @transform_3(%arg0: i32) -> (i32, i32, i32) {
    %c0_i32 = arith.constant 0 : i32
    %c0_i32_0 = arith.constant 0 : i32
    %c0_i32_1 = arith.constant 0 : i32
    return %arg0, %c0_i32, %c0_i32_0 : i32, i32, i32
  }
}

</mosaic_0001>

<llo_original>
// kernel: tpu_custom_call.1
$region0: #{tpu_custom_call.1}
  #allocation0 [shape = 'u32[]', space=smem, size = 0x4, offset = 0x4, fixed_abs, tag = 'smem constant byte address 0x4 - core index']
  #allocation1 [shape = 'u32[144,128]{1,0:T(1,128)}', space=vmem, size = 0x12000, scoped, tag = 'internal scratch']
  %s0 = inlined_call_operand.hbm [shape: f32[16,32], index: 0, kind: input, shape index: {}]
  %s1 = inlined_call_operand.hbm [shape: f32[16,32], index: 1, kind: input, shape index: {}]
  %s2 = inlined_call_operand.hbm [shape: f32[1,8,128], index: 2, kind: output, shape index: {0}]
  %s3 = inlined_call_operand.hbm [shape: f32[1,8,128], index: 3, kind: output, shape index: {1}]
  %4 = xla_tuple %s2, %s3
  %s5 = sld [smem:[#allocation0]]
  $region34: #{tpu_custom_call.1} parent=0
    _
  %s7 = ssub.s32 1, %s5
  %s8 = scalar_select 0, %s7, %s5
  $region1: #{tpu_custom_call.1} parent=0
    #allocation2 [shape = 'u8[8192]{0}', space=vmem, size = 0x2000, scoped, tag = 'input window, operand 0, single buffered']
    #allocation3 [shape = 's32[1]{0}', space=sflag, size = 0x4, scoped, tag = 'scoped memory for tpu_custom_call.1']
    #allocation4 [shape = 's32[1]{0}', space=sflag, size = 0x4, scoped, tag = 'scoped memory for tpu_custom_call.1']
    #allocation5 [shape = 'u8[8192]{0}', space=vmem, size = 0x2000, scoped, tag = 'input window, operand 1, single buffered']
    #allocation6 [shape = 's32[1]{0}', space=sflag, size = 0x4, scoped, tag = 'scoped memory for tpu_custom_call.1']
    #allocation7 [shape = 'u8[4096]{0}', space=vmem, size = 0x1000, scoped, tag = 'output window, operand 0, single buffered']
    #allocation8 [shape = 'u8[4096]{0}', space=vmem, size = 0x1000, scoped, tag = 'output window, operand 1, single buffered']
    #allocation9 [shape = 's32[1]{0}', space=sflag, size = 0x4, scoped, tag = 'scoped memory for tpu_custom_call.1']
    %9 = vsyncpa [#allocation3], 0
    %10 = vsyncpa [#allocation6], 0
    %11 = vsyncpa [#allocation4], 0
    %12 = vsyncpa [#allocation9], 0
    // Predicated region
    $region2: #{tpu_custom_call.1} parent=1 // pred_check
      _
    $region3: #{tpu_custom_call.1} parent=1 // pred_check_branch
      %14 = sbr.rel (0) target = $region5
    $region4: #{tpu_custom_call.1} parent=1 // pred_region
      %s16 = ssub.s32 256, 256
      %17 = vsyncadd [#allocation3], %s16
      %s18 = sshll.u32 [#allocation2], 4
      %s19 = int_to_ptr.vmem [resolvable:$true] %s18
      %24 = dma.hbm_to_vmem [thread:$0]  %s0, 256, %s19, [#allocation3], 128, 128, 8
    $region5: #{tpu_custom_call.1} parent=1 // pred_fallthru
      _
    // Predicated region
    $region6: #{tpu_custom_call.1} parent=1 // pred_check
      _
    $region7: #{tpu_custom_call.1} parent=1 // pred_check_branch
      %26 = sbr.rel (0) target = $region9
    $region8: #{tpu_custom_call.1} parent=1 // pred_region
      %s28 = ssub.s32 256, 256
      %29 = vsyncadd [#allocation6], %s28
      %s30 = sshll.u32 [#allocation5], 4
      %s31 = int_to_ptr.vmem [resolvable:$true] %s30
      %36 = dma.hbm_to_vmem [thread:$0]  %s1, 256, %s31, [#allocation6], 128, 128, 8
    $region9: #{tpu_custom_call.1} parent=1 // pred_fallthru
      _
    // Predicated region
    $region10: #{tpu_custom_call.1} parent=1 // pred_check
      _
    $region11: #{tpu_custom_call.1} parent=1 // pred_check_branch
      %38 = sbr.rel (0) target = $region13
    $region12: #{tpu_custom_call.1} parent=1 // pred_region
      %39 = dma.done [#allocation3], 256
    $region13: #{tpu_custom_call.1} parent=1 // pred_fallthru
      _
    // Predicated region
    $region14: #{tpu_custom_call.1} parent=1 // pred_check
      _
    $region15: #{tpu_custom_call.1} parent=1 // pred_check_branch
      %41 = sbr.rel (0) target = $region17
    $region16: #{tpu_custom_call.1} parent=1 // pred_region
      %42 = dma.done [#allocation6], 256
    $region17: #{tpu_custom_call.1} parent=1 // pred_fallthru
      _
    %v43 = vld [vmem:[#allocation2] sm:$0xff]
    %v44 = vld [vmem:[#allocation2 + $0x8] sm:$0xff]
    %v45 = vld [vmem:[#allocation5] sm:$0xff]
    %v46 = vld [vmem:[#allocation5 + $0x8] sm:$0xff]
    %v47 = vsub.f32 %v43, %v45
    %v48 = vsub.f32 %v44, %v46
    %v49 = vmul.f32 %v47, %v47
    %v50 = vmul.f32 %v48, %v48
    %vm51 = vcmask 261120
    %v52 = vsel %vm51, %v49, 0.0
    %v53 = vsel %vm51, %v50, 0.0
    %v54 = vadd.f32 %v52, %v53
    %55 = vadd.xlane.f32.xlu0 %v54
    %v56 = vpop.xlane.xlu0 %55
    %v57 = vrot.slane %v56, 4
    %v58 = vadd.f32 %v56, %v57
    %v59 = vrot.slane %v58, 2
    %v60 = vadd.f32 %v58, %v59
    %v61 = vrot.slane %v60, 1
    %v62 = vadd.f32 %v60, %v61
    %s63 = vtos %v62
    %v64 = vsel %vm51, %v43, -inf
    %65 = vmax.xlane.f32.xlu0 %v64
    %v66 = vpop.xlane.xlu0 %65
    %v67 = vsel %vm51, %v44, -inf
    %68 = vmax.xlane.f32.xlu0 %v67
    %v69 = vpop.xlane.xlu0 %68
    %v70 = vsel %vm51, %v45, -inf
    %71 = vmax.xlane.f32.xlu0 %v70
    %v72 = vpop.xlane.xlu0 %71
    %v73 = vsel %vm51, %v46, -inf
    %74 = vmax.xlane.f32.xlu0 %v73
    %v75 = vpop.xlane.xlu0 %74
    %v76 = vsub.f32 %v43, %v66
    %v77 = vsub.f32 %v44, %v69
    %v78 = vsub.f32 %v45, %v72
    %v79 = vsub.f32 %v46, %v75
    %v80 = vmul.f32 %v76, 1.442695
    %v81 = vpow.pop %v80
    %v82 = vmul.f32 %v77, 1.442695
    %v83 = vpow.pop %v82
    %v84 = vmul.f32 %v78, 1.442695
    %v85 = vpow.pop %v84
    %v86 = vmul.f32 %v79, 1.442695
    %v87 = vpow.pop %v86
    %v88 = vsel %vm51, %v81, 0.0
    %89 = vadd.xlane.f32.xlu0 %v88
    %v90 = vpop.xlane.xlu0 %89
    %v91 = vsel %vm51, %v83, 0.0
    %92 = vadd.xlane.f32.xlu0 %v91
    %v93 = vpop.xlane.xlu0 %92
    %v94 = vsel %vm51, %v85, 0.0
    %95 = vadd.xlane.f32.xlu0 %v94
    %v96 = vpop.xlane.xlu0 %95
    %v97 = vsel %vm51, %v87, 0.0
    %98 = vadd.xlane.f32.xlu0 %v97
    %v99 = vpop.xlane.xlu0 %98
    %v100 = vrcp.pop %v90
    %v101 = vrcp.pop %v93
    %v102 = vmul.f32 %v81, %v100
    %v103 = vmul.f32 %v83, %v101
    %v104 = vlog2.pop %v90
    %v105 = vmul.f32 %v104, 0.6931472
    %v106 = vlog2.pop %v93
    %v107 = vmul.f32 %v106, 0.6931472
    %v108 = vsub.f32 %v76, %v105
    %v109 = vsub.f32 %v77, %v107
    %v110 = vlog2.pop %v96
    %v111 = vmul.f32 %v110, 0.6931472
    %v112 = vlog2.pop %v99
    %v113 = vmul.f32 %v112, 0.6931472
    %v114 = vsub.f32 %v78, %v111
    %v115 = vsub.f32 %v79, %v113
    %v116 = vsub.f32 %v108, %v114
    %v117 = vsub.f32 %v109, %v115
    %v118 = vadd.f32 %v102, 1e-08
    %v119 = vadd.f32 %v103, 1e-08
    %v120 = vmul.f32 %v118, %v116
    %v121 = vmul.f32 %v119, %v117
    %v122 = vsel %vm51, %v120, 0.0
    %v123 = vsel %vm51, %v121, 0.0
    %v124 = vadd.f32 %v122, %v123
    %125 = vadd.xlane.f32.xlu0 %v124
    %v126 = vpop.xlane.xlu0 %125
    %v127 = vrot.slane %v126, 4
    %v128 = vadd.f32 %v126, %v127
    %v129 = vrot.slane %v128, 2
    %v130 = vadd.f32 %v128, %v129
    %v131 = vrot.slane %v130, 1
    %v132 = vadd.f32 %v130, %v131
    %s133 = vtos %v132
    %v134 = vstv %s63
    %135 = vst [vmem:[#allocation7] sm:$0xff] %v134
    %v136 = vstv %s133
    %137 = vst [vmem:[#allocation8] sm:$0xff] %v136
    // Predicated region
    $region18: #{tpu_custom_call.1} parent=1 // pred_check
      _
    $region19: #{tpu_custom_call.1} parent=1 // pred_check_branch
      %139 = sbr.rel (0) target = $region21
    $region20: #{tpu_custom_call.1} parent=1 // pred_region
      %s141 = ssub.s32 128, 128
      %142 = vsyncadd [#allocation4], %s141
      %s144 = sshll.u32 [#allocation7], 4
      %s145 = int_to_ptr.vmem [resolvable:$true] %s144
      %147 = dma.vmem_to_hbm [thread:$0]  %s145, 128, %s2, [#allocation4]
    $region21: #{tpu_custom_call.1} parent=1 // pred_fallthru
      _
    // Predicated region
    $region22: #{tpu_custom_call.1} parent=1 // pred_check
      _
    $region23: #{tpu_custom_call.1} parent=1 // pred_check_branch
      %149 = sbr.rel (0) target = $region25
    $region24: #{tpu_custom_call.1} parent=1 // pred_region
      %s151 = ssub.s32 128, 128
      %152 = vsyncadd [#allocation9], %s151
      %s154 = sshll.u32 [#allocation8], 4
      %s155 = int_to_ptr.vmem [resolvable:$true] %s154
      %157 = dma.vmem_to_hbm [thread:$0]  %s155, 128, %s3, [#allocation9]
    $region25: #{tpu_custom_call.1} parent=1 // pred_fallthru
      _
    // Predicated region
    $region26: #{tpu_custom_call.1} parent=1 // pred_check
      _
    $region27: #{tpu_custom_call.1} parent=1 // pred_check_branch
      %159 = sbr.rel (0) target = $region29
    $region28: #{tpu_custom_call.1} parent=1 // pred_region
      %160 = dma.done [#allocation4], 128
    $region29: #{tpu_custom_call.1} parent=1 // pred_fallthru
      _
    // Predicated region
    $region30: #{tpu_custom_call.1} parent=1 // pred_check
      _
    $region31: #{tpu_custom_call.1} parent=1 // pred_check_branch
      %162 = sbr.rel (0) target = $region33
    $region32: #{tpu_custom_call.1} parent=1 // pred_region
      %163 = dma.done [#allocation9], 128
    $region33: #{tpu_custom_call.1} parent=1 // pred_fallthru
      _
    %164 = vsyncpa [#allocation3], 1
    %165 = vsyncpa [#allocation6], 1
    %166 = vsyncpa [#allocation4], 1
    %167 = vsyncpa [#allocation9], 1

</llo_original>
